<compile_context>
chip_gen: v7x
topology: tpu7x:2x2x1
jax: 0.10.0
libtpu: 0.0.40
codegen_flags: <defaults>
</compile_context>

<pallas_src>
import jax
import jax.numpy as jnp
from jax.experimental import pallas as pl
from jax.experimental.pallas import tpu as pltpu

EPS = 1e-5
NEG_SLOPE = 0.1
LANE = 128                       # channel (lane-axis) padding granularity
TARGET_ROWS = 2048               # large tiles amortize the ~0.35 us per-grid-step overhead
VMEM_TILE_BUDGET = 20 << 20      # cap on estimated per-pass VMEM footprint (safe on v7x 64 MiB)
VMEM_LIMIT_BYTES = 48 << 20      # raise scoped-VMEM limit above 16/32 MiB defaults, < v7x physical


def _round_up(n, m):
    return (n + m - 1) // m * m


def _lrelu(x):
    return jnp.where(x > 0, x, NEG_SLOPE * x)


def _conv3_rows(x2, wcat_ref, mask_ref, cout):
    """Conv1d(kernel=3, pad=1, stride=1) along the sequence axis.

    x2:       (rows, Cin) activation tile (tb sequences of length L, row-major).
    wcat_ref: (Cin, 3*Cout) weight ref with the three taps concatenated on the lane axis
              (single MXU matmul -> better occupancy of the 256-wide v6e/v7x arrays).
    mask_ref: (rows, 2) f32 host-precomputed edge mask [not_first_row, not_last_row].
    The +/-1 taps are realized with pltpu.roll (XLU) on the unshifted result plus the
    edge mask; taps are accumulated into a single buffer to limit live f32 slabs.
    """
    rows = x2.shape[0]
    ycat = jnp.dot(x2, wcat_ref[...], preferred_element_type=jnp.float32)  # (rows, 3*cout)
    m = mask_ref[...]                                                      # (rows, 2) f32
    y = ycat[:, cout:2 * cout]                                             # center tap
    y = y + m[:, 0:1] * pltpu.roll(ycat[:, 0:cout], shift=1 % rows, axis=0)
    y = y + m[:, 1:2] * pltpu.roll(ycat[:, 2 * cout:3 * cout], shift=(rows - 1) % rows, axis=0)
    return y


def _tile_stats(y):
    """Per-tile (sum, centered sum-of-squares) in f32 — Chan's parallel-variance pieces."""
    rows = y.shape[0]
    s = jnp.sum(y, axis=0, keepdims=True)              # (1, C)
    d = y - s * (1.0 / rows)
    m2 = jnp.sum(d * d, axis=0, keepdims=True)         # (1, C)
    return jnp.concatenate([s, m2], axis=0)            # (2, C)


# ---------------- pass 1: conv1 + shortcut-stats + BN partial stats ----------------
def _stage_a_kernel(x_ref, w1_ref, ws_ref, mask_ref, c1_ref, stats_ref):
    tb, seq, cin = x_ref.shape
    cout = c1_ref.shape[-1]
    x2 = x_ref[...].reshape(tb * seq, cin)
    # conv1 (bias dropped: a per-channel constant before BatchNorm cancels exactly)
    y = _conv3_rows(x2, w1_ref, mask_ref, cout)
    # shortcut 1x1 conv: only its BN statistics are kept; the activation itself is
    # recomputed (bit-identically) in pass 3 to avoid a full (B, L, C) HBM round trip.
    s = jnp.dot(x2, ws_ref[...], preferred_element_type=jnp.float32)
    c1_ref[...] = y.reshape(tb, seq, cout).astype(c1_ref.dtype)
    stats_ref[...] = jnp.concatenate([_tile_stats(y), _tile_stats(s)], axis=0)[None]  # (1,4,C)


# ---------------- pass 2: BN1 affine + LeakyReLU + conv2 + BN2 partial stats ----------
def _stage_b_kernel(c1_ref, w2_ref, a1_ref, b1_ref, mask_ref, c2_ref, stats_ref):
    tb, seq, cout = c1_ref.shape
    h = c1_ref[...].astype(jnp.float32).reshape(tb * seq, cout)
    h = _lrelu(h * a1_ref[...] + b1_ref[...])           # BN1 with global batch stats
    y = _conv3_rows(h.astype(w2_ref.dtype), w2_ref, mask_ref, cout)
    c2_ref[...] = y.reshape(tb, seq, cout).astype(c2_ref.dtype)
    stats_ref[...] = _tile_stats(y)[None]               # (1,2,C)


# ---------------- pass 3: BN2 + shortcut recompute + BN_s + residual + LeakyReLU -------
def _stage_c_kernel(c2_ref, x_ref, ws_ref, a2_ref, b2_ref, as_ref, bs_ref, o_ref):
    tb, seq, cout = c2_ref.shape
    cin = x_ref.shape[-1]
    rows = tb * seq
    c2 = c2_ref[...].astype(jnp.float32).reshape(rows, cout)
    x2 = x_ref[...].reshape(rows, cin)
    s = jnp.dot(x2, ws_ref[...], preferred_element_type=jnp.float32)   # recomputed shortcut
    y = c2 * a2_ref[...] + b2_ref[...] + s * as_ref[...] + bs_ref[...]
    o_ref[...] = _lrelu(y).reshape(tb, seq, cout).astype(o_ref.dtype)


# ---------------- host-side helpers ----------------
def _pad_axis(a, axis, target):
    pad = target - a.shape[axis]
    if pad == 0:
        return a
    widths = [(0, 0)] * a.ndim
    widths[axis] = (0, pad)
    return jnp.pad(a, widths)


def _bn_fold(sum_t, m2_t, n_per_tile, gamma, beta):
    """Combine per-tile (sum, centered M2) into BN scale/shift (Chan's method, biased var)."""
    n_total = n_per_tile * sum_t.shape[0]
    mean = jnp.sum(sum_t, axis=0) / n_total
    tile_mean = sum_t / n_per_tile
    m2 = jnp.sum(m2_t, axis=0) + n_per_tile * jnp.sum((tile_mean - mean) ** 2, axis=0)
    var = jnp.maximum(m2 / n_total, 0.0)
    scale = gamma * jax.lax.rsqrt(var + EPS)
    shift = beta - mean * scale
    return scale.reshape(1, -1).astype(jnp.float32), shift.reshape(1, -1).astype(jnp.float32)


def _pick_tile_batch(B, L, cin_p, cout_p, itemsize, target_rows, vmem_budget):
    """Largest batch-tile that (a) divides B, (b) fits the VMEM budget, (c) leaves >=2 grid
    steps when B >= 2 so both v7x TensorCores get work."""
    # double-buffered loop-invariant weights (conservatively the largest pass)
    fixed = 2 * itemsize * (3 * cout_p * max(cin_p, cout_p) + cin_p * cout_p)
    # per activation row: double-buffered I/O tiles + in-kernel f32 temporaries
    per_row = 2 * itemsize * (cin_p + 2 * cout_p) + 4 * 8 * cout_p
    rows_budget = max(L, (vmem_budget - fixed) // per_row)
    tb = max(1, min(B, max(1, target_rows // L), rows_budget // L))
    while B % tb:                      # per-tile BN sums must cover the batch exactly
        tb -= 1
    if B >= 2 and B // tb < 2:         # give the second TensorCore something to do
        tb = max(d for d in range(1, B // 2 + 1) if B % d == 0)
    return tb


def residual_block_nlc(x_nlc, p, compute_dtype=jnp.bfloat16, target_rows=TARGET_ROWS,
                       keep_padded_channels=False):
    """x_nlc: (B, L, Cin) channels-last. Returns (B, L, Cout) in compute_dtype.

    This is the model-facing entry point: keep activations NLC end-to-end (and ideally
    Cout a multiple of 128, or pass keep_padded_channels=True) so no transpose / slice
    HBM round trips are needed between chained blocks.
    """
    B, L, Cin = x_nlc.shape
    Cout = p["w1"].shape[-1]
    cin_p = _round_up(Cin, LANE)
    cout_p = _round_up(Cout, LANE)
    itemsize = jnp.dtype(compute_dtype).itemsize

    # pad channels onto the 128-lane axis; cast matmul operands (bf16 by default)
    x = _pad_axis(x_nlc.astype(jnp.float32), 2, cin_p).astype(compute_dtype)
    w1p = _pad_axis(_pad_axis(p["w1"], 1, cin_p), 2, cout_p).astype(compute_dtype)
    w2p = _pad_axis(_pad_axis(p["w2"], 1, cout_p), 2, cout_p).astype(compute_dtype)
    ws = _pad_axis(_pad_axis(p["ws"], 0, cin_p), 1, cout_p).astype(compute_dtype)
    # tap-fused conv weights: (Cin, 3*Cout) -> one MXU matmul per tile instead of three
    w1cat = jnp.concatenate([w1p[0], w1p[1], w1p[2]], axis=-1)
    w2cat = jnp.concatenate([w2p[0], w2p[1], w2p[2]], axis=-1)
    g1, be1 = _pad_axis(p["g1"], 0, cout_p), _pad_axis(p["be1"], 0, cout_p)
    g2, be2 = _pad_axis(p["g2"], 0, cout_p), _pad_axis(p["be2"], 0, cout_p)
    gs, bes = _pad_axis(p["gs"], 0, cout_p), _pad_axis(p["bes"], 0, cout_p)
    # conv biases b1/b2/bs are intentionally unused: they cancel inside BatchNorm.

    # tile over batch (full L per tile -> no conv halo); B and L are NOT padded so the
    # BatchNorm statistics match PyTorch exactly.
    tb = _pick_tile_batch(B, L, cin_p, cout_p, itemsize, target_rows, VMEM_TILE_BUDGET)
    nb = B // tb
    rows = tb * L
    n_per_tile = float(rows)

    # host-precomputed conv edge mask: [row is not first of its seq, not last of its seq]
    pos = jnp.arange(rows, dtype=jnp.int32) % L
    mask = jnp.stack([pos != 0, pos != L - 1], axis=1).astype(jnp.float32)   # (rows, 2)

    act = lambda c: pl.BlockSpec((tb, L, c), lambda i: (i, 0, 0))
    full2 = lambda r, c: pl.BlockSpec((r, c), lambda i: (0, 0))
    vec = pl.BlockSpec((1, cout_p), lambda i: (0, 0))
    cparams = pltpu.CompilerParams(dimension_semantics=("parallel",),
                                   vmem_limit_bytes=VMEM_LIMIT_BYTES)

    # ---- pass 1: conv1 (+ shortcut stats)
    c1, st_a = pl.pallas_call(
        _stage_a_kernel,
        grid=(nb,),
        in_specs=[act(cin_p),
                  full2(cin_p, 3 * cout_p),
                  full2(cin_p, cout_p),
                  full2(rows, 2)],
        out_specs=[act(cout_p),
                   pl.BlockSpec((1, 4, cout_p), lambda i: (i, 0, 0))],
        out_shape=[jax.ShapeDtypeStruct((B, L, cout_p), compute_dtype),
                   jax.ShapeDtypeStruct((nb, 4, cout_p), jnp.float32)],
        compiler_params=cparams,
    )(x, w1cat, ws, mask)

    a1, b1 = _bn_fold(st_a[:, 0], st_a[:, 1], n_per_tile, g1, be1)
    as_, bs_ = _bn_fold(st_a[:, 2], st_a[:, 3], n_per_tile, gs, bes)

    # ---- pass 2: BN1 + LeakyReLU + conv2
    c2, st_b = pl.pallas_call(
        _stage_b_kernel,
        grid=(nb,),
        in_specs=[act(cout_p),
                  full2(cout_p, 3 * cout_p),
                  vec, vec,
                  full2(rows, 2)],
        out_specs=[act(cout_p),
                   pl.BlockSpec((1, 2, cout_p), lambda i: (i, 0, 0))],
        out_shape=[jax.ShapeDtypeStruct((B, L, cout_p), compute_dtype),
                   jax.ShapeDtypeStruct((nb, 2, cout_p), jnp.float32)],
        compiler_params=cparams,
    )(c1, w2cat, a1, b1, mask)

    a2, b2 = _bn_fold(st_b[:, 0], st_b[:, 1], n_per_tile, g2, be2)

    # ---- pass 3: BN2 + shortcut recompute + BN_s + residual add + LeakyReLU
    out = pl.pallas_call(
        _stage_c_kernel,
        grid=(nb,),
        in_specs=[act(cout_p), act(cin_p), full2(cin_p, cout_p), vec, vec, vec, vec],
        out_specs=act(cout_p),
        out_shape=jax.ShapeDtypeStruct((B, L, cout_p), compute_dtype),
        compiler_params=cparams,
    )(c2, x, ws, a2, b2, as_, bs_)

    if keep_padded_channels or cout_p == Cout:
        return out
    return out[:, :, :Cout]


def residual_block(x_ncl, p, compute_dtype=jnp.bfloat16, target_rows=TARGET_ROWS):
    """PyTorch-layout wrapper: (B, Cin, L) -> (B, Cout, L). The transposes are full HBM
    round trips — in a real model keep activations NLC and call residual_block_nlc."""
    out = residual_block_nlc(jnp.transpose(x_ncl, (0, 2, 1)), p,
                             compute_dtype=compute_dtype, target_rows=target_rows)
    return jnp.transpose(out, (0, 2, 1))


def init_params(key, in_channels, out_channels):
    ks = jax.random.split(key, 5)
    s1 = 1.0 / (in_channels * 3) ** 0.5
    s2 = 1.0 / (out_channels * 3) ** 0.5
    ss = 1.0 / in_channels ** 0.5
    u = lambda k, shape, s: jax.random.uniform(k, shape, jnp.float32, -s, s)
    return dict(
        w1=u(ks[0], (3, in_channels, out_channels), s1),   # (tap, Cin, Cout)
        b1=u(ks[1], (out_channels,), s1),
        w2=u(ks[2], (3, out_channels, out_channels), s2),
        b2=u(ks[3], (out_channels,), s2),
        ws=u(ks[4], (in_channels, out_channels), ss),      # 1x1 shortcut conv
        bs=jnp.zeros((out_channels,), jnp.float32),
        g1=jnp.ones((out_channels,), jnp.float32), be1=jnp.zeros((out_channels,), jnp.float32),
        g2=jnp.ones((out_channels,), jnp.float32), be2=jnp.zeros((out_channels,), jnp.float32),
        gs=jnp.ones((out_channels,), jnp.float32), bes=jnp.zeros((out_channels,), jnp.float32),
    )


# ---------------- pure-JAX (PyTorch-faithful, f32, with biases) reference ----------------
def _ref_conv3(x, w, b):
    B, L, _ = x.shape
    zp = jnp.zeros((B, 1, x.shape[-1]), jnp.float32)
    xp = jnp.concatenate([zp, x, zp], axis=1)
    y = sum(jnp.einsum("blc,co->blo", xp[:, k:k + L, :], w[k]) for k in range(3))
    return y + b[None, None, :]


def _ref_bn(y, g, be):
    m = jnp.mean(y, axis=(0, 1), keepdims=True)
    v = jnp.mean((y - m) ** 2, axis=(0, 1), keepdims=True)
    return (y - m) / jnp.sqrt(v + EPS) * g[None, None, :] + be[None, None, :]


def _ref_block(x_ncl, p):
    x = jnp.transpose(x_ncl, (0, 2, 1)).astype(jnp.float32)
    lr = lambda z: jnp.where(z > 0, z, NEG_SLOPE * z)
    res = _ref_bn(jnp.einsum("blc,co->blo", x, p["ws"]) + p["bs"][None, None, :],
                  p["gs"], p["bes"])
    h = lr(_ref_bn(_ref_conv3(x, p["w1"], p["b1"]), p["g1"], p["be1"]))
    h = _ref_bn(_ref_conv3(h, p["w2"], p["b2"]), p["g2"], p["be2"])
    return jnp.transpose(lr(h + res), (0, 2, 1))


if __name__ == "__main__":
    key = jax.random.PRNGKey(0)
    kx, kp = jax.random.split(key)

    B, Cin, Cout, L = 4, 4, 8, 16
    x = jax.random.normal(kx, (B, Cin, L), jnp.float32)
    params = init_params(kp, Cin, Cout)

    ref = _ref_block(x, params)

    # f32 compute path (default tiling -> tb=2, nb=2): structural check vs the reference
    out_f32 = jax.block_until_ready(residual_block(x, params, compute_dtype=jnp.float32))
    assert out_f32.shape == (B, Cout, L)
    assert jnp.allclose(out_f32.astype(jnp.float32), ref, rtol=1e-3, atol=1e-3), \
        "f32 mismatch vs reference"

    # finer-grid path (tb=1 -> 4 grid steps): checks the tiled Chan BN-stats reduction
    out_tiled = jax.block_until_ready(
        residual_block(x, params, compute_dtype=jnp.float32, target_rows=16))
    assert jnp.allclose(out_tiled.astype(jnp.float32), ref, rtol=1e-3, atol=1e-3), \
        "tiled mismatch vs reference"

    # default bf16 path (perf): bf16 matmul operands, bf16 activations and output
    out_bf16 = jax.block_until_ready(residual_block(x, params))
    assert jnp.allclose(out_bf16.astype(jnp.float32), ref, rtol=1e-1, atol=1e-1), \
        "bf16 mismatch vs reference"

    print("KERNEL_OK")
</pallas_src>

<mosaic_0001>
module attributes {stable_mosaic.version = 11 : i64} {
  func.func @_stage_a_kernel(%arg0: i32, %arg1: memref<2x16x128xf32, #tpu.memory_space<vmem>>, %arg2: memref<128x384xf32, #tpu.memory_space<vmem>>, %arg3: memref<128x128xf32, #tpu.memory_space<vmem>>, %arg4: memref<32x2xf32, #tpu.memory_space<vmem>>, %arg5: memref<2x16x128xf32, #tpu.memory_space<vmem>>, %arg6: memref<1x4x128xf32, #tpu.memory_space<vmem>>) attributes {dimension_semantics = [#tpu.dimension_semantics<parallel>], iteration_bounds = array<i64: 2>, scalar_prefetch = 0 : i64, scratch_operands = 0 : i64, tpu.core_type = #tpu.core_type<tc>, window_params = [{transform_indices = @transform_0, window_bounds = array<i64: 2, 16, 128>}, {pipeline_mode = #tpu.pipeline_mode<synchronous>, transform_indices = @transform_1, window_bounds = array<i64: 128, 384>}, {pipeline_mode = #tpu.pipeline_mode<synchronous>, transform_indices = @transform_2, window_bounds = array<i64: 128, 128>}, {pipeline_mode = #tpu.pipeline_mode<synchronous>, transform_indices = @transform_3, window_bounds = array<i64: 32, 2>}, {transform_indices = @transform_4, window_bounds = array<i64: 2, 16, 128>}, {transform_indices = @transform_5, window_bounds = array<i64: 1, 4, 128>}]} {
    %c0 = arith.constant 0 : index
    %c0_0 = arith.constant 0 : index
    %c0_1 = arith.constant 0 : index
    %0 = vector.load %arg1[%c0, %c0_0, %c0_1] : memref<2x16x128xf32, #tpu.memory_space<vmem>>, vector<2x16x128xf32>
    %1 = vector.shape_cast %0 : vector<2x16x128xf32> to vector<32x128xf32>
    %c0_2 = arith.constant 0 : index
    %c0_3 = arith.constant 0 : index
    %2 = vector.load %arg2[%c0_2, %c0_3] : memref<128x384xf32, #tpu.memory_space<vmem>>, vector<128x384xf32>
    %cst = arith.constant dense<0.000000e+00> : vector<32x384xf32>
    %3 = tpu.matmul %1, %2, %cst {dimension_numbers = #tpu.dot_dimension_numbers<[1], [0], [0], [1], [0, 0, 1, 1], [], []>} : vector<32x128xf32>, vector<128x384xf32>, vector<32x384xf32> -> vector<32x384xf32>
    %c0_4 = arith.constant 0 : index
    %c0_5 = arith.constant 0 : index
    %4 = vector.load %arg4[%c0_4, %c0_5] : memref<32x2xf32, #tpu.memory_space<vmem>>, vector<32x2xf32>
    %5 = vector.extract_strided_slice %3 {offsets = [0, 128], sizes = [32, 128], strides = [1, 1]} : vector<32x384xf32> to vector<32x128xf32>
    %6 = vector.extract_strided_slice %4 {offsets = [0, 0], sizes = [32, 1], strides = [1, 1]} : vector<32x2xf32> to vector<32x1xf32>
    %7 = vector.extract_strided_slice %3 {offsets = [0, 0], sizes = [32, 128], strides = [1, 1]} : vector<32x384xf32> to vector<32x128xf32>
    %c1_i32 = arith.constant 1 : i32
    %8 = tpu.dynamic_rotate %7 by %c1_i32 dim 0 : vector<32x128xf32>, i32 -> vector<32x128xf32>
    %9 = vector.broadcast %6 : vector<32x1xf32> to vector<32x128xf32>
    %10 = arith.mulf %9, %8 : vector<32x128xf32>
    %11 = arith.addf %5, %10 : vector<32x128xf32>
    %12 = vector.extract_strided_slice %4 {offsets = [0, 1], sizes = [32, 1], strides = [1, 1]} : vector<32x2xf32> to vector<32x1xf32>
    %13 = vector.extract_strided_slice %3 {offsets = [0, 256], sizes = [32, 128], strides = [1, 1]} : vector<32x384xf32> to vector<32x128xf32>
    %c31_i32 = arith.constant 31 : i32
    %14 = tpu.dynamic_rotate %13 by %c31_i32 dim 0 : vector<32x128xf32>, i32 -> vector<32x128xf32>
    %15 = vector.broadcast %12 : vector<32x1xf32> to vector<32x128xf32>
    %16 = arith.mulf %15, %14 : vector<32x128xf32>
    %17 = arith.addf %11, %16 : vector<32x128xf32>
    %c0_6 = arith.constant 0 : index
    %c0_7 = arith.constant 0 : index
    %18 = vector.load %arg3[%c0_6, %c0_7] : memref<128x128xf32, #tpu.memory_space<vmem>>, vector<128x128xf32>
    %cst_8 = arith.constant dense<0.000000e+00> : vector<32x128xf32>
    %19 = tpu.matmul %1, %18, %cst_8 {dimension_numbers = #tpu.dot_dimension_numbers<[1], [0], [0], [1], [0, 0, 1, 1], [], []>} : vector<32x128xf32>, vector<128x128xf32>, vector<32x128xf32> -> vector<32x128xf32>
    %20 = vector.shape_cast %17 : vector<32x128xf32> to vector<2x16x128xf32>
    %c0_9 = arith.constant 0 : index
    %c0_10 = arith.constant 0 : index
    %c0_11 = arith.constant 0 : index
    %21 = vector.load %arg5[%c0_9, %c0_10, %c0_11] : memref<2x16x128xf32, #tpu.memory_space<vmem>>, vector<2x16x128xf32>
    tpu.vector_store %arg5[%c0_9, %c0_10, %c0_11], %20 {strides = array<i32>} : memref<2x16x128xf32, #tpu.memory_space<vmem>>, vector<2x16x128xf32>,
    %cst_12 = arith.constant dense<0.000000e+00> : vector<128xf32>
    %22 = vector.multi_reduction <add>, %17, %cst_12 [0] : vector<32x128xf32> to vector<128xf32>
    %23 = vector.shape_cast %22 : vector<128xf32> to vector<1x128xf32>
    %cst_13 = arith.constant 3.125000e-02 : f32
    %24 = vector.broadcast %cst_13 : f32 to vector<1x128xf32>
    %25 = arith.mulf %23, %24 : vector<1x128xf32>
    %26 = vector.broadcast %25 : vector<1x128xf32> to vector<32x128xf32>
    %27 = arith.subf %17, %26 : vector<32x128xf32>
    %28 = arith.mulf %27, %27 : vector<32x128xf32>
    %cst_14 = arith.constant dense<0.000000e+00> : vector<128xf32>
    %29 = vector.multi_reduction <add>, %28, %cst_14 [0] : vector<32x128xf32> to vector<128xf32>
    %30 = vector.shape_cast %29 : vector<128xf32> to vector<1x128xf32>
    %31 = tpu.concatenate %23, %30 in 0 : vector<1x128xf32>, vector<1x128xf32> -> vector<2x128xf32>
    %cst_15 = arith.constant dense<0.000000e+00> : vector<128xf32>
    %32 = vector.multi_reduction <add>, %19, %cst_15 [0] : vector<32x128xf32> to vector<128xf32>
    %33 = vector.shape_cast %32 : vector<128xf32> to vector<1x128xf32>
    %cst_16 = arith.constant 3.125000e-02 : f32
    %34 = vector.broadcast %cst_16 : f32 to vector<1x128xf32>
    %35 = arith.mulf %33, %34 : vector<1x128xf32>
    %36 = vector.broadcast %35 : vector<1x128xf32> to vector<32x128xf32>
    %37 = arith.subf %19, %36 : vector<32x128xf32>
    %38 = arith.mulf %37, %37 : vector<32x128xf32>
    %cst_17 = arith.constant dense<0.000000e+00> : vector<128xf32>
    %39 = vector.multi_reduction <add>, %38, %cst_17 [0] : vector<32x128xf32> to vector<128xf32>
    %40 = vector.shape_cast %39 : vector<128xf32> to vector<1x128xf32>
    %41 = tpu.concatenate %33, %40 in 0 : vector<1x128xf32>, vector<1x128xf32> -> vector<2x128xf32>
    %42 = tpu.concatenate %31, %41 in 0 : vector<2x128xf32>, vector<2x128xf32> -> vector<4x128xf32>
    %43 = vector.shape_cast %42 : vector<4x128xf32> to vector<1x4x128xf32>
    %c0_18 = arith.constant 0 : index
    %c0_19 = arith.constant 0 : index
    %c0_20 = arith.constant 0 : index
    %44 = vector.load %arg6[%c0_18, %c0_19, %c0_20] : memref<1x4x128xf32, #tpu.memory_space<vmem>>, vector<1x4x128xf32>
    tpu.vector_store %arg6[%c0_18, %c0_19, %c0_20], %43 {strides = array<i32>} : memref<1x4x128xf32, #tpu.memory_space<vmem>>, vector<1x4x128xf32>,
    return
  }
  func.func @transform_0(%arg0: i32) -> (i32, i32, i32) {
    %c0_i32 = arith.constant 0 : i32
    %c0_i32_0 = arith.constant 0 : i32
    %c0_i32_1 = arith.constant 0 : i32
    return %arg0, %c0_i32, %c0_i32_0 : i32, i32, i32
  }
  func.func @transform_1(%arg0: i32) -> (i32, i32) {
    %c0_i32 = arith.constant 0 : i32
    %c0_i32_0 = arith.constant 0 : i32
    %c0_i32_1 = arith.constant 0 : i32
    return %c0_i32, %c0_i32_0 : i32, i32
  }
  func.func @transform_2(%arg0: i32) -> (i32, i32) {
    %c0_i32 = arith.constant 0 : i32
    %c0_i32_0 = arith.constant 0 : i32
    %c0_i32_1 = arith.constant 0 : i32
    return %c0_i32, %c0_i32_0 : i32, i32
  }
  func.func @transform_3(%arg0: i32) -> (i32, i32) {
    %c0_i32 = arith.constant 0 : i32
    %c0_i32_0 = arith.constant 0 : i32
    %c0_i32_1 = arith.constant 0 : i32
    return %c0_i32, %c0_i32_0 : i32, i32
  }
  func.func @transform_4(%arg0: i32) -> (i32, i32, i32) {
    %c0_i32 = arith.constant 0 : i32
    %c0_i32_0 = arith.constant 0 : i32
    %c0_i32_1 = arith.constant 0 : i32
    return %arg0, %c0_i32, %c0_i32_0 : i32, i32, i32
  }
  func.func @transform_5(%arg0: i32) -> (i32, i32, i32) {
    %c0_i32 = arith.constant 0 : i32
    %c0_i32_0 = arith.constant 0 : i32
    %c0_i32_1 = arith.constant 0 : i32
    return %arg0, %c0_i32, %c0_i32_0 : i32, i32, i32
  }
}

</mosaic_0001>

<llo_original>
// kernel: tpu_custom_call.1
$region0: #{tpu_custom_call.1}
  #allocation0 [shape = 'u32[]', space=smem, size = 0x4, offset = 0x4, fixed_abs, tag = 'smem constant byte address 0x4 - core index']
  #allocation1 [shape = 'u32[144,128]{1,0:T(1,128)}', space=vmem, size = 0x12000, scoped, tag = 'internal scratch']
  %s0 = inlined_call_operand.hbm [shape: f32[4,16,128], index: 0, kind: input, shape index: {}]
  %s1 = inlined_call_operand.hbm [shape: f32[128,384], index: 1, kind: input, shape index: {}]
  %s2 = inlined_call_operand.hbm [shape: f32[128,128], index: 2, kind: input, shape index: {}]
  %s3 = inlined_call_operand.vmem [shape: f32[32,2], index: 3, kind: input, shape index: {}]
  %s4 = inlined_call_operand.hbm [shape: f32[4,16,128], index: 4, kind: output, shape index: {0}]
  %s5 = inlined_call_operand.hbm [shape: f32[2,4,128], index: 5, kind: output, shape index: {1}]
  %6 = xla_tuple %s4, %s5
  %s7 = sld [smem:[#allocation0]]
  $region69: #{tpu_custom_call.1} parent=0
    _
  %s9 = ssub.s32 1, %s7
  %s10 = scalar_select 0, %s9, %s7
  $region1: #{tpu_custom_call.1} parent=0
    #allocation2 [shape = 'u8[32768]{0}', space=vmem, size = 0x8000, scoped, tag = 'input window, operand 0']
    #allocation3 [shape = 's32[2]{0}', space=sflag, size = 0x8, scoped, tag = 'scoped memory for tpu_custom_call.1']
    #allocation4 [shape = 's32[2]{0}', space=sflag, size = 0x8, scoped, tag = 'scoped memory for tpu_custom_call.1']
    #allocation5 [shape = 'u8[196608]{0}', space=vmem, size = 0x30000, scoped, tag = 'input window, operand 1, single buffered']
    #allocation6 [shape = 's32[1]{0}', space=sflag, size = 0x4, scoped, tag = 'scoped memory for tpu_custom_call.1']
    #allocation7 [shape = 'u8[65536]{0}', space=vmem, size = 0x10000, scoped, tag = 'input window, operand 2, single buffered']
    #allocation8 [shape = 'u8[32768]{0}', space=vmem, size = 0x8000, scoped, tag = 'output window, operand 0']
    #allocation9 [shape = 'u8[4096]{0}', space=vmem, size = 0x1000, scoped, tag = 'output window, operand 1']
    #allocation10 [shape = 's32[2]{0}', space=sflag, size = 0x8, scoped, tag = 'scoped memory for tpu_custom_call.1']
    %11 = vsyncpa [#allocation3], 0
    %s12 = scalar_lea.sflag [#allocation3], 1
    %13 = vsyncpa %s12, 0
    %14 = vsyncpa [#allocation6], 0
    %15 = vsyncpa [#allocation4], 0
    %s16 = scalar_lea.sflag [#allocation4], 1
    %17 = vsyncpa %s16, 0
    %18 = vsyncpa [#allocation10], 0
    %s19 = scalar_lea.sflag [#allocation10], 1
    %20 = vsyncpa %s19, 0
    loop: start=0, step=1, limit=4
    $region2: #{tpu_custom_call.1} parent=1 // loop_pre_header
      _
    $region3: #{tpu_custom_call.1} parent=1 // loop_header
      %s22 = sphi 0, %s26
      %p23 = scmp.ge.s32.totalorder %s22, 4
      %s32 = sphi 0, %s34
      %s35 = sphi 0, %s32
      %s36 = sphi 0, %s35
      %s52 = sphi 0, %s36
      %s56 = sphi 0, %s56
      %s58 = sphi 0, %s56
      %s59 = sphi 0, %s58
      %s73 = sphi 0, %s59
      %s77 = sphi 0, %s77
      %s79 = sphi 0, %s77
      %s80 = sphi 0, %s79
      %s94 = sphi 0, %s80
      %s98 = sphi 0, %s98
      %s100 = sphi 0, %s98
      %s101 = sphi 0, %s100
      %s115 = sphi 0, %s101
      %s121 = sphi 0, %s123
      %s124 = sphi 0, %s121
      %s125 = sphi 0, %s124
      %s141 = sphi 0, %s125
      %s147 = sphi 0, %s149
      %s150 = sphi 0, %s147
      %s151 = sphi 0, %s150
      %s167 = sphi 0, %s151
    $region4: #{tpu_custom_call.1} parent=1 // loop_header_branch
      %25 = sbr.rel (%p23) target = $region8
    $region5: #{tpu_custom_call.1} parent=1 // loop_body
      %s27 = ssub.s32 %s22, 1
      %s28 = ssub.s32 %s22, 2
      %s29 = sadd.s32 %s22, 1
      %s30 = ssub.s32 %s22, %s29
      %p31 = scmp.eq.s32.totalorder %s30, 0
      %s33 = sadd.s32 %s32, 1
      %s34 = scalar_select %p31, %s32, %s33
      %p37 = pneg %p31
      %p38 = scmp.eq.s32.totalorder %s22, 1
      %p39 = por %p37, %p38
      %p40 = scmp.ne.s32.totalorder %s32, %s35
      %p41 = scmp.eq.s32.totalorder %s22, 0
      %p42 = por %p40, %p41
      %p43 = scmp.ne.s32.totalorder %s32, %s35
      %p44 = scmp.eq.s32.totalorder %s27, 1
      %p45 = por %p43, %p44
      %p46 = scmp.ne.s32.totalorder %s35, %s36
      %p47 = scmp.eq.s32.totalorder %s27, 0
      %p48 = por %p46, %p47
      %p49 = scmp.ne.s32.totalorder %s35, %s36
      %p50 = scmp.eq.s32.totalorder %s28, 1
      %p51 = por %p49, %p50
      %p53 = scmp.ne.s32.totalorder %s36, %s52
      %p54 = scmp.eq.s32.totalorder %s28, 0
      %p55 = por %p53, %p54
      %s57 = sadd.s32 %s56, 1
      %p60 = scmp.eq.s32.totalorder %s22, 1
      %p61 = scmp.ne.s32.totalorder %s56, %s58
      %p62 = scmp.eq.s32.totalorder %s22, 0
      %p63 = por %p61, %p62
      %p64 = scmp.ne.s32.totalorder %s56, %s58
      %p65 = scmp.eq.s32.totalorder %s27, 1
      %p66 = por %p64, %p65
      %p67 = scmp.ne.s32.totalorder %s58, %s59
      %p68 = scmp.eq.s32.totalorder %s27, 0
      %p69 = por %p67, %p68
      %p70 = scmp.ne.s32.totalorder %s58, %s59
      %p71 = scmp.eq.s32.totalorder %s28, 1
      %p72 = por %p70, %p71
      %p74 = scmp.ne.s32.totalorder %s59, %s73
      %p75 = scmp.eq.s32.totalorder %s28, 0
      %p76 = por %p74, %p75
      %s78 = sadd.s32 %s77, 1
      %p81 = scmp.eq.s32.totalorder %s22, 1
      %p82 = scmp.ne.s32.totalorder %s77, %s79
      %p83 = scmp.eq.s32.totalorder %s22, 0
      %p84 = por %p82, %p83
      %p85 = scmp.ne.s32.totalorder %s77, %s79
      %p86 = scmp.eq.s32.totalorder %s27, 1
      %p87 = por %p85, %p86
      %p88 = scmp.ne.s32.totalorder %s79, %s80
      %p89 = scmp.eq.s32.totalorder %s27, 0
      %p90 = por %p88, %p89
      %p91 = scmp.ne.s32.totalorder %s79, %s80
      %p92 = scmp.eq.s32.totalorder %s28, 1
      %p93 = por %p91, %p92
      %p95 = scmp.ne.s32.totalorder %s80, %s94
      %p96 = scmp.eq.s32.totalorder %s28, 0
      %p97 = por %p95, %p96
      %s99 = sadd.s32 %s98, 1
      %p102 = scmp.eq.s32.totalorder %s22, 1
      %p103 = scmp.ne.s32.totalorder %s98, %s100
      %p104 = scmp.eq.s32.totalorder %s22, 0
      %p105 = por %p103, %p104
      %p106 = scmp.ne.s32.totalorder %s98, %s100
      %p107 = scmp.eq.s32.totalorder %s27, 1
      %p108 = por %p106, %p107
      %p109 = scmp.ne.s32.totalorder %s100, %s101
      %p110 = scmp.eq.s32.totalorder %s27, 0
      %p111 = por %p109, %p110
      %p112 = scmp.ne.s32.totalorder %s100, %s101
      %p113 = scmp.eq.s32.totalorder %s28, 1
      %p114 = por %p112, %p113
      %p116 = scmp.ne.s32.totalorder %s101, %s115
      %p117 = scmp.eq.s32.totalorder %s28, 0
      %p118 = por %p116, %p117
      %s119 = ssub.s32 %s22, %s29
      %p120 = scmp.eq.s32.totalorder %s119, 0
      %s122 = sadd.s32 %s121, 1
      %s123 = scalar_select %p120, %s121, %s122
      %p126 = pneg %p120
      %p127 = scmp.eq.s32.totalorder %s22, 1
      %p128 = por %p126, %p127
      %p129 = scmp.ne.s32.totalorder %s121, %s124
      %p130 = scmp.eq.s32.totalorder %s22, 0
      %p131 = por %p129, %p130
      %p132 = scmp.ne.s32.totalorder %s121, %s124
      %p133 = scmp.eq.s32.totalorder %s27, 1
      %p134 = por %p132, %p133
      %p135 = scmp.ne.s32.totalorder %s124, %s125
      %p136 = scmp.eq.s32.totalorder %s27, 0
      %p137 = por %p135, %p136
      %p138 = scmp.ne.s32.totalorder %s124, %s125
      %p139 = scmp.eq.s32.totalorder %s28, 1
      %p140 = por %p138, %p139
      %p142 = scmp.ne.s32.totalorder %s125, %s141
      %p143 = scmp.eq.s32.totalorder %s28, 0
      %p144 = por %p142, %p143
      %s145 = ssub.s32 %s22, %s29
      %p146 = scmp.eq.s32.totalorder %s145, 0
      %s148 = sadd.s32 %s147, 1
      %s149 = scalar_select %p146, %s147, %s148
      %p152 = pneg %p146
      %p153 = scmp.eq.s32.totalorder %s22, 1
      %p154 = por %p152, %p153
      %p155 = scmp.ne.s32.totalorder %s147, %s150
      %p156 = scmp.eq.s32.totalorder %s22, 0
      %p157 = por %p155, %p156
      %p158 = scmp.ne.s32.totalorder %s147, %s150
      %p159 = scmp.eq.s32.totalorder %s27, 1
      %p160 = por %p158, %p159
      %p161 = scmp.ne.s32.totalorder %s150, %s151
      %p162 = scmp.eq.s32.totalorder %s27, 0
      %p163 = por %p161, %p162
      %p164 = scmp.ne.s32.totalorder %s150, %s151
      %p165 = scmp.eq.s32.totalorder %s28, 1
      %p166 = por %p164, %p165
      %p168 = scmp.ne.s32.totalorder %s151, %s167
      %p169 = scmp.eq.s32.totalorder %s28, 0
      %p170 = por %p168, %p169
      %p171 = scmp.le.s32.totalorder 1, %s22
      %p172 = scmp.lt.s32.totalorder %s22, 3
      %p173 = pnand %p171, %p172
      %p174 = pneg %p173
      // Predicated region
      $region9: #{tpu_custom_call.1} parent=5 // pred_check
        _
      $region10: #{tpu_custom_call.1} parent=5 // pred_check_branch
        %176 = sbr.rel (%p173) target = $region12
      $region11: #{tpu_custom_call.1} parent=5 // pred_region
        %s177 = ssub.s32 %s22, 1
        // Predicated region
        $region13: #{tpu_custom_call.1} parent=11 // pred_check
          %p178 = pneg %p69
        $region14: #{tpu_custom_call.1} parent=11 // pred_check_branch
          %180 = sbr.rel (%p178) target = $region16
        $region15: #{tpu_custom_call.1} parent=11 // pred_region
          %s182 = ssub.s32 6144, 6144
          %183 = vsyncadd [#allocation6], %s182
          %s184 = sshll.u32 [#allocation5], 4
          %s185 = int_to_ptr.vmem [resolvable:$true] %s184
          %190 = dma.hbm_to_vmem [thread:$0]  %s1, 6144, %s185, [#allocation6], 384, 384, 24
        $region16: #{tpu_custom_call.1} parent=11 // pred_fallthru
          _
        // Predicated region
        $region17: #{tpu_custom_call.1} parent=11 // pred_check
          %p191 = pneg %p90
        $region18: #{tpu_custom_call.1} parent=11 // pred_check_branch
          %193 = sbr.rel (%p191) target = $region20
        $region19: #{tpu_custom_call.1} parent=11 // pred_region
          %s195 = ssub.s32 2048, 2048
          %196 = vsyncadd [#allocation6], %s195
          %s197 = sshll.u32 [#allocation7], 4
          %s198 = int_to_ptr.vmem [resolvable:$true] %s197
          %203 = dma.hbm_to_vmem [thread:$0]  %s2, 2048, %s198, [#allocation6], 128, 128, 8
        $region20: #{tpu_custom_call.1} parent=11 // pred_fallthru
          _
        // Predicated region
        $region21: #{tpu_custom_call.1} parent=11 // pred_check
          %p204 = pneg %p111
        $region22: #{tpu_custom_call.1} parent=11 // pred_check_branch
          %206 = sbr.rel (%p204) target = $region24
        $region23: #{tpu_custom_call.1} parent=11 // pred_region
          _
        $region24: #{tpu_custom_call.1} parent=11 // pred_fallthru
          _
      $region12: #{tpu_custom_call.1} parent=5 // pred_fallthru
        _
      %p207 = scmp.lt.s32.totalorder %s22, 2
      // Predicated region
      $region25: #{tpu_custom_call.1} parent=5 // pred_check
        %p208 = pneg %p207
      $region26: #{tpu_custom_call.1} parent=5 // pred_check_branch
        %210 = sbr.rel (%p208) target = $region28
      $region27: #{tpu_custom_call.1} parent=5 // pred_region
        // Predicated region
        $region29: #{tpu_custom_call.1} parent=27 // pred_check
          %p211 = pneg %p42
        $region30: #{tpu_custom_call.1} parent=27 // pred_check_branch
          %213 = sbr.rel (%p211) target = $region32
        $region31: #{tpu_custom_call.1} parent=27 // pred_region
          %s214 = sand.u32 %s32, 1
          %s215 = scalar_lea.sflag [#allocation3], %s214
          %s216 = sand.u32 %s32, 1
          %s217 = smul.addr %s216, 32
          %s218 = scalar_lea.vmem [#allocation2], %s217
          %s219 = smul.u32 2, %s22
          %s221 = ssub.s32 512, 512
          %222 = vsyncadd %s215, %s221
          %s223 = smul.addr %s219, 2
          %s224 = smul.addr %s223, 128
          %s225 = scalar_lea.hbm %s0, %s224
          %s226 = sshll.u32 %s218, 4
          %s227 = int_to_ptr.vmem [resolvable:$true] %s226
          %232 = dma.hbm_to_vmem [thread:$0]  %s225, 512, %s227, %s215, 128, 128, 8
        $region32: #{tpu_custom_call.1} parent=27 // pred_fallthru
          _
      $region28: #{tpu_custom_call.1} parent=5 // pred_fallthru
        _
      %p233 = scmp.le.s32.totalorder 1, %s22
      %p234 = scmp.lt.s32.totalorder %s22, 3
      %p235 = pnand %p233, %p234
      %p236 = pneg %p235
      // Predicated region
      $region33: #{tpu_custom_call.1} parent=5 // pred_check
        _
      $region34: #{tpu_custom_call.1} parent=5 // pred_check_branch
        %238 = sbr.rel (%p235) target = $region36
      $region35: #{tpu_custom_call.1} parent=5 // pred_region
        %s239 = ssub.s32 %s22, 1
        %s240 = sand.u32 %s35, 1
        %s241 = scalar_lea.sflag [#allocation3], %s240
        %s242 = sand.u32 %s35, 1
        %s243 = smul.addr %s242, 32
        %s244 = scalar_lea.vmem [#allocation2], %s243
        // Predicated region
        $region37: #{tpu_custom_call.1} parent=35 // pred_check
          %p245 = pneg %p48
        $region38: #{tpu_custom_call.1} parent=35 // pred_check_branch
          %247 = sbr.rel (%p245) target = $region40
        $region39: #{tpu_custom_call.1} parent=35 // pred_region
          %248 = dma.done %s241, 512
        $region40: #{tpu_custom_call.1} parent=35 // pred_fallthru
          _
        // Predicated region
        $region41: #{tpu_custom_call.1} parent=35 // pred_check
          %p249 = pneg %p69
        $region42: #{tpu_custom_call.1} parent=35 // pred_check_branch
          %251 = sbr.rel (%p249) target = $region44
        $region43: #{tpu_custom_call.1} parent=35 // pred_region
          %252 = dma.done [#allocation6], 6144
        $region44: #{tpu_custom_call.1} parent=35 // pred_fallthru
          _
        // Predicated region
        $region45: #{tpu_custom_call.1} parent=35 // pred_check
          %p253 = pneg %p90
        $region46: #{tpu_custom_call.1} parent=35 // pred_check_branch
          %255 = sbr.rel (%p253) target = $region48
        $region47: #{tpu_custom_call.1} parent=35 // pred_region
          %256 = dma.done [#allocation6], 2048
        $region48: #{tpu_custom_call.1} parent=35 // pred_fallthru
          _
        %s257 = sand.u32 %s35, 1
        %s258 = scalar_lea.sflag [#allocation3], %s257
        %s259 = sand.u32 %s35, 1
        %s260 = smul.addr %s259, 32
        %s261 = scalar_lea.vmem [#allocation2], %s260
        %p262 = pneg %p48
        %p263 = pneg %p45
        %p264 = pneg %p69
        %p265 = pneg %p66
        %p266 = pneg %p90
        %p267 = pneg %p87
        %p268 = pneg %p111
        %p269 = pneg %p108
        %p270 = pneg %p137
        %p271 = pneg %p134
        %s272 = sand.u32 %s124, 1
        %s273 = scalar_lea.sflag [#allocation4], %s272
        %s274 = sand.u32 %s124, 1
        %s275 = smul.addr %s274, 32
        %s276 = scalar_lea.vmem [#allocation8], %s275
        %p277 = pneg %p163
        %p278 = pneg %p160
        %s279 = sand.u32 %s150, 1
        %s280 = scalar_lea.sflag [#allocation10], %s279
        %s281 = sand.u32 %s150, 1
        %s282 = smul.addr %s281, 4
        %s283 = scalar_lea.vmem [#allocation9], %s282
        %s284 = smul.u32 2, %s27
        %s285 = smul.u32 2, %s27
        %v286 = vld [vmem:[%s244] sm:$0xff]
        %v287 = vld [vmem:[%s244 + $0x8] sm:$0xff]
        %v288 = vld [vmem:[%s244 + $0x10] sm:$0xff]
        %v289 = vld [vmem:[%s244 + $0x18] sm:$0xff]
        %v290 = vld [vmem:[#allocation5] sm:$0xff]
        %v291 = vld [vmem:[#allocation5 + $0x8] sm:$0xff]
        %v292 = vld [vmem:[#allocation5 + $0x10] sm:$0xff]
        %v293 = vld [vmem:[#allocation5 + $0x18] sm:$0xff]
        %v294 = vld [vmem:[#allocation5 + $0x20] sm:$0xff]
        %v295 = vld [vmem:[#allocation5 + $0x28] sm:$0xff]
        %v296 = vld [vmem:[#allocation5 + $0x30] sm:$0xff]
        %v297 = vld [vmem:[#allocation5 + $0x38] sm:$0xff]
        %v298 = vld [vmem:[#allocation5 + $0x40] sm:$0xff]
        %v299 = vld [vmem:[#allocation5 + $0x48] sm:$0xff]
        %v300 = vld [vmem:[#allocation5 + $0x50] sm:$0xff]
        %v301 = vld [vmem:[#allocation5 + $0x58] sm:$0xff]
        %v302 = vld [vmem:[#allocation5 + $0x60] sm:$0xff]
        %v303 = vld [vmem:[#allocation5 + $0x68] sm:$0xff]
        %v304 = vld [vmem:[#allocation5 + $0x70] sm:$0xff]
        %v305 = vld [vmem:[#allocation5 + $0x78] sm:$0xff]
        %v306 = vld [vmem:[#allocation5 + $0x80] sm:$0xff]
        %v307 = vld [vmem:[#allocation5 + $0x88] sm:$0xff]
        %v308 = vld [vmem:[#allocation5 + $0x90] sm:$0xff]
        %v309 = vld [vmem:[#allocation5 + $0x98] sm:$0xff]
        %v310 = vld [vmem:[#allocation5 + $0xa0] sm:$0xff]
        %v311 = vld [vmem:[#allocation5 + $0xa8] sm:$0xff]
        %v312 = vld [vmem:[#allocation5 + $0xb0] sm:$0xff]
        %v313 = vld [vmem:[#allocation5 + $0xb8] sm:$0xff]
        %v314 = vld [vmem:[#allocation5 + $0xc0] sm:$0xff]
        %v315 = vld [vmem:[#allocation5 + $0xc8] sm:$0xff]
        %v316 = vld [vmem:[#allocation5 + $0xd0] sm:$0xff]
        %v317 = vld [vmem:[#allocation5 + $0xd8] sm:$0xff]
        %v318 = vld [vmem:[#allocation5 + $0xe0] sm:$0xff]
        %v319 = vld [vmem:[#allocation5 + $0xe8] sm:$0xff]
        %v320 = vld [vmem:[#allocation5 + $0xf0] sm:$0xff]
        %v321 = vld [vmem:[#allocation5 + $0xf8] sm:$0xff]
        %v322 = vld [vmem:[#allocation5 + $0x100] sm:$0xff]
        %v323 = vld [vmem:[#allocation5 + $0x108] sm:$0xff]
        %v324 = vld [vmem:[#allocation5 + $0x110] sm:$0xff]
        %v325 = vld [vmem:[#allocation5 + $0x118] sm:$0xff]
        %v326 = vld [vmem:[#allocation5 + $0x120] sm:$0xff]
        %v327 = vld [vmem:[#allocation5 + $0x128] sm:$0xff]
        %v328 = vld [vmem:[#allocation5 + $0x130] sm:$0xff]
        %v329 = vld [vmem:[#allocation5 + $0x138] sm:$0xff]
        %v330 = vld [vmem:[#allocation5 + $0x140] sm:$0xff]
        %v331 = vld [vmem:[#allocation5 + $0x148] sm:$0xff]
        %v332 = vld [vmem:[#allocation5 + $0x150] sm:$0xff]
        %v333 = vld [vmem:[#allocation5 + $0x158] sm:$0xff]
        %v334 = vld [vmem:[#allocation5 + $0x160] sm:$0xff]
        %v335 = vld [vmem:[#allocation5 + $0x168] sm:$0xff]
        %v336 = vld [vmem:[#allocation5 + $0x170] sm:$0xff]
        %v337 = vld [vmem:[#allocation5 + $0x178] sm:$0xff]
        %338 = vmatprep.subr.mxu0 %v291
        %339 = vmatpush1.msra.mxu0 %v290
        %340 = vmatprep.subr.mxu0 %v294
        %341 = vmatpush1.msra.mxu0 %v293
        %342 = vmatprep.subr.mxu0 %v297
        %343 = vmatpush1.msra.mxu0 %v296
        %344 = vmatprep.subr.mxu0 %v300
        %345 = vmatpush1.msra.mxu0 %v299
        %346 = vmatprep.subr.mxu0 %v303
        %347 = vmatpush1.msra.mxu0 %v302
        %348 = vmatprep.subr.mxu0 %v306
        %349 = vmatpush1.msra.mxu0 %v305
        %350 = vmatprep.subr.mxu0 %v309
        %351 = vmatpush1.msra.mxu0 %v308
        %352 = vmatprep.subr.mxu0 %v312
        %353 = vmatpush1.msra.mxu0 %v311
        %354 = vmatprep.subr.mxu0 %v315
        %355 = vmatpush1.msra.mxu0 %v314
        %356 = vmatprep.subr.mxu0 %v318
        %357 = vmatpush1.msra.mxu0 %v317
        %358 = vmatprep.subr.mxu0 %v321
        %359 = vmatpush1.msra.mxu0 %v320
        %360 = vmatprep.subr.mxu0 %v324
        %361 = vmatpush1.msra.mxu0 %v323
        %362 = vmatprep.subr.mxu0 %v327
        %363 = vmatpush1.msra.mxu0 %v326
        %364 = vmatprep.subr.mxu0 %v330
        %365 = vmatpush1.msra.mxu0 %v329
        %366 = vmatprep.subr.mxu0 %v333
        %367 = vmatpush1.msra.mxu0 %v332
        %368 = vmatprep.subr.mxu0 %v336
        %369 = vmatpush1.msra.mxu0 %v335
        %370 = vmatprep.subr.mxu0 0.0
        %371 = vmatpush1.msra.mxu0 0.0
        %372 = vmatprep.subr.mxu0 0.0
        %373 = vmatpush1.msra.mxu0 0.0
        %374 = vmatprep.subr.mxu0 0.0
        %375 = vmatpush1.msra.mxu0 0.0
        %376 = vmatprep.subr.mxu0 0.0
        %377 = vmatpush1.msra.mxu0 0.0
        %378 = vmatprep.subr.mxu0 0.0
        %379 = vmatpush1.msra.mxu0 0.0
        %380 = vmatprep.subr.mxu0 0.0
        %381 = vmatpush1.msra.mxu0 0.0
        %382 = vmatprep.subr.mxu0 0.0
        %383 = vmatpush1.msra.mxu0 0.0
        %384 = vmatprep.subr.mxu0 0.0
        %385 = vmatpush1.msra.mxu0 0.0
        %386 = vmatprep.subr.mxu0 0.0
        %387 = vmatpush1.msra.mxu0 0.0
        %388 = vmatprep.subr.mxu0 0.0
        %389 = vmatpush1.msra.mxu0 0.0
        %390 = vmatprep.subr.mxu0 0.0
        %391 = vmatpush1.msra.mxu0 0.0
        %392 = vmatprep.subr.mxu0 0.0
        %393 = vmatpush1.msra.mxu0 0.0
        %394 = vmatprep.subr.mxu0 0.0
        %395 = vmatpush1.msra.mxu0 0.0
        %396 = vmatprep.subr.mxu0 0.0
        %397 = vmatpush1.msra.mxu0 0.0
        %398 = vmatprep.subr.mxu0 0.0
        %399 = vmatpush1.msra.mxu0 0.0
        %400 = vmatprep.subr.mxu0 0.0
        %401 = vmatpush1.msra.mxu0 0.0
        %402 = vmatprep.mubr.f32.mxu0 0.0
        %403 = vmatmul.mubr.f32.gmra.mrb[0].mxu0 %v286
        %v404 = vpop.f32.mrb[0].mxu0
        %v405 = vadd.f32 0.0, %v404
        %v406 = vpop.f32.mrb[0].mxu0
        %v407 = vadd.f32 0.0, %v406
        %408 = vmatprep.mubr.f32.mxu0 0.0
        %409 = vmatmul.mubr.f32.gmra.mrb[0].mxu0 %v287
        %v410 = vpop.f32.mrb[0].mxu0
        %v411 = vadd.f32 0.0, %v410
        %v412 = vpop.f32.mrb[0].mxu0
        %v413 = vadd.f32 0.0, %v412
        %414 = vmatprep.mubr.f32.mxu0 0.0
        %415 = vmatmul.mubr.f32.gmra.mrb[0].mxu0 %v288
        %v416 = vpop.f32.mrb[0].mxu0
        %v417 = vadd.f32 0.0, %v416
        %v418 = vpop.f32.mrb[0].mxu0
        %v419 = vadd.f32 0.0, %v418
        %420 = vmatprep.mubr.f32.mxu0 0.0
        %421 = vmatmul.mubr.f32.gmra.mrb[0].mxu0 %v289
        %v422 = vpop.f32.mrb[0].mxu0
        %v423 = vadd.f32 0.0, %v422
        %v424 = vpop.f32.mrb[0].mxu0
        %v425 = vadd.f32 0.0, %v424
        %426 = vdwg.mxu0
        %427 = vmatprep.subr.mxu0 0.0
        %428 = vmatpush1.msra.mxu0 %v292
        %429 = vmatprep.subr.mxu0 0.0
        %430 = vmatpush1.msra.mxu0 %v295
        %431 = vmatprep.subr.mxu0 0.0
        %432 = vmatpush1.msra.mxu0 %v298
        %433 = vmatprep.subr.mxu0 0.0
        %434 = vmatpush1.msra.mxu0 %v301
        %435 = vmatprep.subr.mxu0 0.0
        %436 = vmatpush1.msra.mxu0 %v304
        %437 = vmatprep.subr.mxu0 0.0
        %438 = vmatpush1.msra.mxu0 %v307
        %439 = vmatprep.subr.mxu0 0.0
        %440 = vmatpush1.msra.mxu0 %v310
        %441 = vmatprep.subr.mxu0 0.0
        %442 = vmatpush1.msra.mxu0 %v313
        %443 = vmatprep.subr.mxu0 0.0
        %444 = vmatpush1.msra.mxu0 %v316
        %445 = vmatprep.subr.mxu0 0.0
        %446 = vmatpush1.msra.mxu0 %v319
        %447 = vmatprep.subr.mxu0 0.0
        %448 = vmatpush1.msra.mxu0 %v322
        %449 = vmatprep.subr.mxu0 0.0
        %450 = vmatpush1.msra.mxu0 %v325
        %451 = vmatprep.subr.mxu0 0.0
        %452 = vmatpush1.msra.mxu0 %v328
        %453 = vmatprep.subr.mxu0 0.0
        %454 = vmatpush1.msra.mxu0 %v331
        %455 = vmatprep.subr.mxu0 0.0
        %456 = vmatpush1.msra.mxu0 %v334
        %457 = vmatprep.subr.mxu0 0.0
        %458 = vmatpush1.msra.mxu0 %v337
        %459 = vmatprep.subr.mxu0 0.0
        %460 = vmatpush1.msra.mxu0 0.0
        %461 = vmatprep.subr.mxu0 0.0
        %462 = vmatpush1.msra.mxu0 0.0
        %463 = vmatprep.subr.mxu0 0.0
        %464 = vmatpush1.msra.mxu0 0.0
        %465 = vmatprep.subr.mxu0 0.0
        %466 = vmatpush1.msra.mxu0 0.0
        %467 = vmatprep.subr.mxu0 0.0
        %468 = vmatpush1.msra.mxu0 0.0
        %469 = vmatprep.subr.mxu0 0.0
        %470 = vmatpush1.msra.mxu0 0.0
        %471 = vmatprep.subr.mxu0 0.0
        %472 = vmatpush1.msra.mxu0 0.0
        %473 = vmatprep.subr.mxu0 0.0
        %474 = vmatpush1.msra.mxu0 0.0
        %475 = vmatprep.subr.mxu0 0.0
        %476 = vmatpush1.msra.mxu0 0.0
        %477 = vmatprep.subr.mxu0 0.0
        %478 = vmatpush1.msra.mxu0 0.0
        %479 = vmatprep.subr.mxu0 0.0
        %480 = vmatpush1.msra.mxu0 0.0
        %481 = vmatprep.subr.mxu0 0.0
        %482 = vmatpush1.msra.mxu0 0.0
        %483 = vmatprep.subr.mxu0 0.0
        %484 = vmatpush1.msra.mxu0 0.0
        %485 = vmatprep.subr.mxu0 0.0
        %486 = vmatpush1.msra.mxu0 0.0
        %487 = vmatprep.subr.mxu0 0.0
        %488 = vmatpush1.msra.mxu0 0.0
        %489 = vmatprep.subr.mxu0 0.0
        %490 = vmatpush1.msra.mxu0 0.0
        %491 = vmatprep.mubr.f32.mxu0 0.0
        %492 = vmatmul.mubr.f32.gmra.mrb[0].mxu0 %v286
        %v493 = vpop.f32.mrb[0].mxu0
        %v494 = vadd.f32 0.0, %v493
        %v495 = vpop.f32.mrb[0].mxu0
        %496 = vmatprep.mubr.f32.mxu0 0.0
        %497 = vmatmul.mubr.f32.gmra.mrb[0].mxu0 %v287
        %v498 = vpop.f32.mrb[0].mxu0
        %v499 = vadd.f32 0.0, %v498
        %v500 = vpop.f32.mrb[0].mxu0
        %501 = vmatprep.mubr.f32.mxu0 0.0
        %502 = vmatmul.mubr.f32.gmra.mrb[0].mxu0 %v288
        %v503 = vpop.f32.mrb[0].mxu0
        %v504 = vadd.f32 0.0, %v503
        %v505 = vpop.f32.mrb[0].mxu0
        %506 = vmatprep.mubr.f32.mxu0 0.0
        %507 = vmatmul.mubr.f32.gmra.mrb[0].mxu0 %v289
        %v508 = vpop.f32.mrb[0].mxu0
        %v509 = vadd.f32 0.0, %v508
        %v510 = vpop.f32.mrb[0].mxu0
        %511 = vdwg.mxu0
        %v512 = vld [vmem:[%s3] sm:$0xff]
        %v513 = vld [vmem:[%s3 + $0x8] sm:$0xff]
        %v514 = vld [vmem:[%s3 + $0x10] sm:$0xff]
        %v515 = vld [vmem:[%s3 + $0x18] sm:$0xff]
        %v516 = vrot.slane %v405, 7
        %v517 = vrot.slane %v411, 7
        %v518 = vrot.slane %v417, 7
        %v519 = vrot.slane %v423, 7
        %v520 = vlaneseq
        %v521 = vshrl.u32 %v520, 7
        %vm522 = vcmp.lt.s32.totalorder %v521, 1
        %v523 = vsel %vm522, %v518, %v519
        %v524 = vsel %vm522, %v517, %v518
        %v525 = vsel %vm522, %v516, %v517
        %v526 = vsel %vm522, %v519, %v516
        %528 = vset.pattern.permute.xlu0 0
        %529 = vperm.xlu0 %528, %v512
        %v530 = vpop.permute.xlu0 %529
        %533 = vset.pattern.permute.xlu0 0
        %534 = vperm.xlu0 %533, %v513
        %v535 = vpop.permute.xlu0 %534
        %538 = vset.pattern.permute.xlu0 0
        %539 = vperm.xlu0 %538, %v514
        %v540 = vpop.permute.xlu0 %539
        %543 = vset.pattern.permute.xlu0 0
        %544 = vperm.xlu0 %543, %v515
        %v545 = vpop.permute.xlu0 %544
        %v547 = vmul.f32 %v530, %v526
        %v548 = vmul.f32 %v535, %v525
        %v549 = vmul.f32 %v540, %v524
        %v550 = vmul.f32 %v545, %v523
        %v551 = vadd.f32 %v407, %v547
        %v552 = vadd.f32 %v413, %v548
        %v553 = vadd.f32 %v419, %v549
        %v554 = vadd.f32 %v425, %v550
        %v555 = vrot.slane %v494, 1
        %v556 = vrot.slane %v499, 1
        %v557 = vrot.slane %v504, 1
        %v558 = vrot.slane %v509, 1
        %vm559 = vcmp.lt.s32.totalorder %v521, 7
        %v560 = vsel %vm559, %v557, %v558
        %v561 = vsel %vm559, %v556, %v557
        %v562 = vsel %vm559, %v555, %v556
        %v563 = vsel %vm559, %v558, %v555
        %564 = vset.pattern.permute.xlu0 1
        %565 = vperm.xlu0 %564, %v512
        %v566 = vpop.permute.xlu0 %565
        %568 = vset.pattern.permute.xlu0 1
        %569 = vperm.xlu0 %568, %v513
        %v570 = vpop.permute.xlu0 %569
        %572 = vset.pattern.permute.xlu0 1
        %573 = vperm.xlu0 %572, %v514
        %v574 = vpop.permute.xlu0 %573
        %576 = vset.pattern.permute.xlu0 1
        %577 = vperm.xlu0 %576, %v515
        %v578 = vpop.permute.xlu0 %577
        %v580 = vmul.f32 %v566, %v562
        %v581 = vmul.f32 %v570, %v561
        %v582 = vmul.f32 %v574, %v560
        %v583 = vmul.f32 %v578, %v563
        %v584 = vadd.f32 %v551, %v580
        %v585 = vadd.f32 %v552, %v581
        %v586 = vadd.f32 %v553, %v582
        %v587 = vadd.f32 %v554, %v583
        %v588 = vld [vmem:[#allocation7] sm:$0xff]
        %v589 = vld [vmem:[#allocation7 + $0x8] sm:$0xff]
        %v590 = vld [vmem:[#allocation7 + $0x10] sm:$0xff]
        %v591 = vld [vmem:[#allocation7 + $0x18] sm:$0xff]
        %v592 = vld [vmem:[#allocation7 + $0x20] sm:$0xff]
        %v593 = vld [vmem:[#allocation7 + $0x28] sm:$0xff]
        %v594 = vld [vmem:[#allocation7 + $0x30] sm:$0xff]
        %v595 = vld [vmem:[#allocation7 + $0x38] sm:$0xff]
        %v596 = vld [vmem:[#allocation7 + $0x40] sm:$0xff]
        %v597 = vld [vmem:[#allocation7 + $0x48] sm:$0xff]
        %v598 = vld [vmem:[#allocation7 + $0x50] sm:$0xff]
        %v599 = vld [vmem:[#allocation7 + $0x58] sm:$0xff]
        %v600 = vld [vmem:[#allocation7 + $0x60] sm:$0xff]
        %v601 = vld [vmem:[#allocation7 + $0x68] sm:$0xff]
        %v602 = vld [vmem:[#allocation7 + $0x70] sm:$0xff]
        %v603 = vld [vmem:[#allocation7 + $0x78] sm:$0xff]
        %604 = vmatprep.subr.mxu0 0.0
        %605 = vmatpush1.msra.mxu0 %v588
        %606 = vmatprep.subr.mxu0 0.0
        %607 = vmatpush1.msra.mxu0 %v589
        %608 = vmatprep.subr.mxu0 0.0
        %609 = vmatpush1.msra.mxu0 %v590
        %610 = vmatprep.subr.mxu0 0.0
        %611 = vmatpush1.msra.mxu0 %v591
        %612 = vmatprep.subr.mxu0 0.0
        %613 = vmatpush1.msra.mxu0 %v592
        %614 = vmatprep.subr.mxu0 0.0
        %615 = vmatpush1.msra.mxu0 %v593
        %616 = vmatprep.subr.mxu0 0.0
        %617 = vmatpush1.msra.mxu0 %v594
        %618 = vmatprep.subr.mxu0 0.0
        %619 = vmatpush1.msra.mxu0 %v595
        %620 = vmatprep.subr.mxu0 0.0
        %621 = vmatpush1.msra.mxu0 %v596
        %622 = vmatprep.subr.mxu0 0.0
        %623 = vmatpush1.msra.mxu0 %v597
        %624 = vmatprep.subr.mxu0 0.0
        %625 = vmatpush1.msra.mxu0 %v598
        %626 = vmatprep.subr.mxu0 0.0
        %627 = vmatpush1.msra.mxu0 %v599
        %628 = vmatprep.subr.mxu0 0.0
        %629 = vmatpush1.msra.mxu0 %v600
        %630 = vmatprep.subr.mxu0 0.0
        %631 = vmatpush1.msra.mxu0 %v601
        %632 = vmatprep.subr.mxu0 0.0
        %633 = vmatpush1.msra.mxu0 %v602
        %634 = vmatprep.subr.mxu0 0.0
        %635 = vmatpush1.msra.mxu0 %v603
        %636 = vmatprep.subr.mxu0 0.0
        %637 = vmatpush1.msra.mxu0 0.0
        %638 = vmatprep.subr.mxu0 0.0
        %639 = vmatpush1.msra.mxu0 0.0
        %640 = vmatprep.subr.mxu0 0.0
        %641 = vmatpush1.msra.mxu0 0.0
        %642 = vmatprep.subr.mxu0 0.0
        %643 = vmatpush1.msra.mxu0 0.0
        %644 = vmatprep.subr.mxu0 0.0
        %645 = vmatpush1.msra.mxu0 0.0
        %646 = vmatprep.subr.mxu0 0.0
        %647 = vmatpush1.msra.mxu0 0.0
        %648 = vmatprep.subr.mxu0 0.0
        %649 = vmatpush1.msra.mxu0 0.0
        %650 = vmatprep.subr.mxu0 0.0
        %651 = vmatpush1.msra.mxu0 0.0
        %652 = vmatprep.subr.mxu0 0.0
        %653 = vmatpush1.msra.mxu0 0.0
        %654 = vmatprep.subr.mxu0 0.0
        %655 = vmatpush1.msra.mxu0 0.0
        %656 = vmatprep.subr.mxu0 0.0
        %657 = vmatpush1.msra.mxu0 0.0
        %658 = vmatprep.subr.mxu0 0.0
        %659 = vmatpush1.msra.mxu0 0.0
        %660 = vmatprep.subr.mxu0 0.0
        %661 = vmatpush1.msra.mxu0 0.0
        %662 = vmatprep.subr.mxu0 0.0
        %663 = vmatpush1.msra.mxu0 0.0
        %664 = vmatprep.subr.mxu0 0.0
        %665 = vmatpush1.msra.mxu0 0.0
        %666 = vmatprep.subr.mxu0 0.0
        %667 = vmatpush1.msra.mxu0 0.0
        %668 = vmatprep.mubr.f32.mxu0 0.0
        %669 = vmatmul.mubr.f32.gmra.mrb[0].mxu0 %v286
        %v670 = vpop.f32.mrb[0].mxu0
        %v671 = vadd.f32 0.0, %v670
        %v672 = vpop.f32.mrb[0].mxu0
        %673 = vmatprep.mubr.f32.mxu0 0.0
        %674 = vmatmul.mubr.f32.gmra.mrb[0].mxu0 %v287
        %v675 = vpop.f32.mrb[0].mxu0
        %v676 = vadd.f32 0.0, %v675
        %v677 = vpop.f32.mrb[0].mxu0
        %678 = vmatprep.mubr.f32.mxu0 0.0
        %679 = vmatmul.mubr.f32.gmra.mrb[0].mxu0 %v288
        %v680 = vpop.f32.mrb[0].mxu0
        %v681 = vadd.f32 0.0, %v680
        %v682 = vpop.f32.mrb[0].mxu0
        %683 = vmatprep.mubr.f32.mxu0 0.0
        %684 = vmatmul.mubr.f32.gmra.mrb[0].mxu0 %v289
        %v685 = vpop.f32.mrb[0].mxu0
        %v686 = vadd.f32 0.0, %v685
        %v687 = vpop.f32.mrb[0].mxu0
        %688 = vdwg.mxu0
        %689 = vst [vmem:[%s276] sm:$0xff] %v584
        %690 = vst [vmem:[%s276 + $0x8] sm:$0xff] %v585
        %691 = vst [vmem:[%s276 + $0x10] sm:$0xff] %v586
        %692 = vst [vmem:[%s276 + $0x18] sm:$0xff] %v587
        %v693 = vadd.f32 %v584, %v585
        %v694 = vadd.f32 %v693, %v586
        %v695 = vadd.f32 %v694, %v587
        %v696 = vrot.slane %v695, 4
        %v697 = vadd.f32 %v695, %v696
        %v698 = vrot.slane %v697, 2
        %v699 = vadd.f32 %v697, %v698
        %v700 = vrot.slane %v699, 1
        %v701 = vadd.f32 %v699, %v700
        %v702 = vmul.f32 %v701, 0.03125
        %v703 = vsub.f32 %v584, %v702
        %v704 = vsub.f32 %v585, %v702
        %v705 = vsub.f32 %v586, %v702
        %v706 = vsub.f32 %v587, %v702
        %v707 = vmul.f32 %v703, %v703
        %v708 = vmul.f32 %v704, %v704
        %v709 = vmul.f32 %v705, %v705
        %v710 = vmul.f32 %v706, %v706
        %v711 = vadd.f32 %v707, %v708
        %v712 = vadd.f32 %v711, %v709
        %v713 = vadd.f32 %v712, %v710
        %v714 = vrot.slane %v713, 4
        %v715 = vadd.f32 %v713, %v714
        %v716 = vrot.slane %v715, 2
        %v717 = vadd.f32 %v715, %v716
        %v718 = vrot.slane %v717, 1
        %v719 = vadd.f32 %v717, %v718
        %vm720 = vcmask 1040384
        %v721 = vsel %vm720, %v701, %v719
        %v722 = vadd.f32 %v671, %v676
        %v723 = vadd.f32 %v722, %v681
        %v724 = vadd.f32 %v723, %v686
        %v725 = vrot.slane %v724, 4
        %v726 = vadd.f32 %v724, %v725
        %v727 = vrot.slane %v726, 2
        %v728 = vadd.f32 %v726, %v727
        %v729 = vrot.slane %v728, 1
        %v730 = vadd.f32 %v728, %v729
        %v731 = vmul.f32 %v730, 0.03125
        %v732 = vsub.f32 %v671, %v731
        %v733 = vsub.f32 %v676, %v731
        %v734 = vsub.f32 %v681, %v731
        %v735 = vsub.f32 %v686, %v731
        %v736 = vmul.f32 %v732, %v732
        %v737 = vmul.f32 %v733, %v733
        %v738 = vmul.f32 %v734, %v734
        %v739 = vmul.f32 %v735, %v735
        %v740 = vadd.f32 %v736, %v737
        %v741 = vadd.f32 %v740, %v738
        %v742 = vadd.f32 %v741, %v739
        %v743 = vrot.slane %v742, 4
        %v744 = vadd.f32 %v742, %v743
        %v745 = vrot.slane %v744, 2
        %v746 = vadd.f32 %v744, %v745
        %v747 = vrot.slane %v746, 1
        %v748 = vadd.f32 %v746, %v747
        %v749 = vsel %vm720, %v730, %v748
        %v751 = vrot.slane %v749, 6
        %vm753 = vcmask 1041408
        %v754 = vsel %vm753, %v721, %v751
        %755 = vst [vmem:[%s283] sm:$0xf] %v754
        %s756 = sand.u32 %s124, 1
        %s757 = scalar_lea.sflag [#allocation4], %s756
        %s758 = sand.u32 %s124, 1
        %s759 = smul.addr %s758, 32
        %s760 = scalar_lea.vmem [#allocation8], %s759
        %s761 = sand.u32 %s150, 1
        %s762 = scalar_lea.sflag [#allocation10], %s761
        %s763 = sand.u32 %s150, 1
        %s764 = smul.addr %s763, 4
        %s765 = scalar_lea.vmem [#allocation9], %s764
        // Predicated region
        $region49: #{tpu_custom_call.1} parent=35 // pred_check
          %p766 = pneg %p134
        $region50: #{tpu_custom_call.1} parent=35 // pred_check_branch
          %768 = sbr.rel (%p766) target = $region52
        $region51: #{tpu_custom_call.1} parent=35 // pred_region
          %s769 = smul.u32 2, %s27
          %s771 = ssub.s32 512, 512
          %772 = vsyncadd %s757, %s771
          %s773 = smul.addr %s769, 2
          %s774 = smul.addr %s773, 128
          %s775 = scalar_lea.hbm %s4, %s774
          %s776 = sshll.u32 %s760, 4
          %s777 = int_to_ptr.vmem [resolvable:$true] %s776
          %782 = dma.vmem_to_hbm [thread:$0]  %s777, 512, %s775, %s757, 128, 128, 8
        $region52: #{tpu_custom_call.1} parent=35 // pred_fallthru
          _
        // Predicated region
        $region53: #{tpu_custom_call.1} parent=35 // pred_check
          %p783 = pneg %p160
        $region54: #{tpu_custom_call.1} parent=35 // pred_check_branch
          %785 = sbr.rel (%p783) target = $region56
        $region55: #{tpu_custom_call.1} parent=35 // pred_region
          %s787 = ssub.s32 64, 64
          %788 = vsyncadd %s762, %s787
          %s789 = smul.addr %s27, 64
          %s790 = scalar_lea.hbm %s5, %s789
          %s792 = sshll.u32 %s765, 4
          %s793 = int_to_ptr.vmem [resolvable:$true] %s792
          %795 = dma.vmem_to_hbm [thread:$0]  %s793, 64, %s790, %s762
        $region56: #{tpu_custom_call.1} parent=35 // pred_fallthru
          _
      $region36: #{tpu_custom_call.1} parent=5 // pred_fallthru
        _
      %p796 = scmp.le.s32.totalorder 2, %s22
      // Predicated region
      $region57: #{tpu_custom_call.1} parent=5 // pred_check
        %p797 = pneg %p796
      $region58: #{tpu_custom_call.1} parent=5 // pred_check_branch
        %799 = sbr.rel (%p797) target = $region60
      $region59: #{tpu_custom_call.1} parent=5 // pred_region
        %s800 = ssub.s32 %s22, 2
        // Predicated region
        $region61: #{tpu_custom_call.1} parent=59 // pred_check
          %p801 = pneg %p140
        $region62: #{tpu_custom_call.1} parent=59 // pred_check_branch
          %803 = sbr.rel (%p801) target = $region64
        $region63: #{tpu_custom_call.1} parent=59 // pred_region
          %s804 = sand.u32 %s125, 1
          %s805 = scalar_lea.sflag [#allocation4], %s804
          %s806 = sand.u32 %s125, 1
          %s807 = smul.addr %s806, 32
          %s808 = scalar_lea.vmem [#allocation8], %s807
          %809 = dma.done %s805, 512
        $region64: #{tpu_custom_call.1} parent=59 // pred_fallthru
          _
        // Predicated region
        $region65: #{tpu_custom_call.1} parent=59 // pred_check
          %p810 = pneg %p166
        $region66: #{tpu_custom_call.1} parent=59 // pred_check_branch
          %812 = sbr.rel (%p810) target = $region68
        $region67: #{tpu_custom_call.1} parent=59 // pred_region
          %s813 = sand.u32 %s151, 1
          %s814 = scalar_lea.sflag [#allocation10], %s813
          %s815 = sand.u32 %s151, 1
          %s816 = smul.addr %s815, 4
          %s817 = scalar_lea.vmem [#allocation9], %s816
          %818 = dma.done %s814, 64
        $region68: #{tpu_custom_call.1} parent=59 // pred_fallthru
          _
      $region60: #{tpu_custom_call.1} parent=5 // pred_fallthru
        _
    $region6: #{tpu_custom_call.1} parent=1 // loop_footer
      %s26 = sadd.s32 1, %s22
    $region7: #{tpu_custom_call.1} parent=1 // loop_footer_branch
      %21 = sbr.rel target = $region3
    $region8: #{tpu_custom_call.1} parent=1 // loop_exit
      _
    %819 = vsyncpa [#allocation3], 1
    %s820 = scalar_lea.sflag [#allocation3], 1
    %821 = vsyncpa %s820, 1
    %822 = vsyncpa [#allocation6], 1
    %823 = vsyncpa [#allocation4], 1
    %s824 = scalar_lea.sflag [#allocation4], 1
    %825 = vsyncpa %s824, 1
    %826 = vsyncpa [#allocation10], 1
    %s827 = scalar_lea.sflag [#allocation10], 1
    %828 = vsyncpa %s827, 1

</llo_original>
